<compile_context>
chip_gen: v7x
topology: tpu7x:2x2x1
jax: 0.10.0
libtpu: 0.0.40
codegen_flags: <defaults>
</compile_context>

<pallas_src>
import functools

import jax
import jax.numpy as jnp
from jax.experimental import pallas as pl
from jax.experimental.pallas import tpu as pltpu


def _fused_mlp_kernel(*refs, n_layers, activations):
    """Whole MLP forward in one kernel invocation.

    refs = (x_ref, w1_ref, b1_ref, ..., wN_ref, bN_ref, o_ref)
      x_ref : (TB, D_in)        VMEM  (one batch tile)
      wi_ref: (D_{i-1}, D_i)    VMEM  (resident across grid)
      bi_ref: (1, D_i)          VMEM  (resident across grid)
      o_ref : (TB, D_out)       VMEM
    All intermediates live in vregs; nothing touches HBM between layers.
    """
    x_ref = refs[0]
    o_ref = refs[-1]

    h = x_ref[...]
    for i in range(n_layers):
        w_ref = refs[1 + 2 * i]
        b_ref = refs[2 + 2 * i]
        h = jnp.dot(h, w_ref[...], preferred_element_type=jnp.float32)
        h = h + b_ref[...]  # broadcast (1, D_out) over batch rows
        act = activations[i]
        if act == "relu":
            h = jnp.maximum(h, 0.0)
        elif act == "tanh":
            h = jnp.tanh(h)
        # act is None -> identity (final layer, activation_final=None)
    o_ref[...] = h.astype(o_ref.dtype)


def mlp_forward(x, params, activations, activation_final=None, *, batch_tile=None):
    """Fused forward pass of the MLP as a single pallas_call.

    params: list of (W, b) with W shaped (in_features, out_features).
    The batch axis is tiled by `batch_tile` (multiple of 8) and marked
    "parallel"; weights/biases are small (<10 KB total) and stay resident.
    """
    n_layers = len(params)
    acts = tuple(
        activation_final if i == n_layers - 1 else activations[i]
        for i in range(n_layers)
    )

    batch, d_in = x.shape
    d_out = params[-1][0].shape[1]

    # Pick a batch tile: multiple of 8 sublanes, capped so double-buffered
    # input/output tiles comfortably fit even v7x's smaller VMEM budget.
    if batch_tile is None:
        batch_tile = min(batch, 256)
    batch_tile = max(8, (batch_tile // 8) * 8)

    # Pad batch so the grid divides evenly (pad rows are sliced off below).
    batch_padded = ((batch + batch_tile - 1) // batch_tile) * batch_tile
    if batch_padded != batch:
        x = jnp.pad(x, ((0, batch_padded - batch), (0, 0)))

    grid = (batch_padded // batch_tile,)

    in_specs = [pl.BlockSpec((batch_tile, d_in), lambda i: (i, 0))]
    flat_inputs = [x]
    for w, b in params:
        di, do = w.shape
        # Weights/biases: same block for every grid step -> stay resident in VMEM.
        in_specs.append(pl.BlockSpec((di, do), lambda i: (0, 0)))
        in_specs.append(pl.BlockSpec((1, do), lambda i: (0, 0)))
        flat_inputs.append(w)
        flat_inputs.append(b)

    out = pl.pallas_call(
        functools.partial(_fused_mlp_kernel, n_layers=n_layers, activations=acts),
        out_shape=jax.ShapeDtypeStruct((batch_padded, d_out), jnp.float32),
        grid=grid,
        in_specs=in_specs,
        out_specs=pl.BlockSpec((batch_tile, d_out), lambda i: (i, 0)),
        compiler_params=pltpu.CompilerParams(
            dimension_semantics=("parallel",),  # v7x: shard batch tiles over 2 TCs
        ),
    )(*flat_inputs)

    if batch_padded != batch:
        out = out[:batch]
    return out


def init_mlp_params(key, input_shape, units):
    """Deterministic init matching nn.Linear's default U(-1/sqrt(in), 1/sqrt(in)).

    Returns list of (W, b) with W shaped (in_features, out_features).
    """
    dims = [input_shape] + list(units)
    params = []
    for i in range(len(units)):
        d_in, d_out = dims[i], dims[i + 1]
        key, wk, bk = jax.random.split(key, 3)
        bound = 1.0 / (d_in ** 0.5)
        w = jax.random.uniform(wk, (d_in, d_out), jnp.float32, -bound, bound)
        b = jax.random.uniform(bk, (1, d_out), jnp.float32, -bound, bound)
        params.append((w, b))
    return params


if __name__ == "__main__":
    # Small, module-consistent shapes (batch large enough to exercise the grid).
    batch = 64
    input_shape = 32
    units = [32, 32, 16]
    activations = ["relu"] * len(units)
    activation_final = None  # matches `activation_final=None` in __init__

    key = jax.random.PRNGKey(0)
    key, xk = jax.random.split(key)
    x = jax.random.normal(xk, (batch, input_shape), jnp.float32)

    params = init_mlp_params(key, input_shape, units)

    out = mlp_forward(x, params, activations, activation_final, batch_tile=32)
    out = jax.block_until_ready(out)

    # Cross-check against a plain-JAX reference of the same math.
    ref = x
    for i, (w, b) in enumerate(params):
        ref = ref @ w + b
        if i != len(params) - 1:
            ref = jnp.maximum(ref, 0.0)

    assert out.shape == (batch, units[-1])
    assert jnp.allclose(out, ref, atol=1e-5, rtol=1e-5)

    print("KERNEL_OK")
</pallas_src>

<mosaic_0001>
module attributes {stable_mosaic.version = 11 : i64} {
  func.func @_fused_mlp_kernel(%arg0: i32, %arg1: memref<32x32xf32, #tpu.memory_space<vmem>>, %arg2: memref<32x32xf32, #tpu.memory_space<vmem>>, %arg3: memref<1x32xf32, #tpu.memory_space<vmem>>, %arg4: memref<32x32xf32, #tpu.memory_space<vmem>>, %arg5: memref<1x32xf32, #tpu.memory_space<vmem>>, %arg6: memref<32x16xf32, #tpu.memory_space<vmem>>, %arg7: memref<1x16xf32, #tpu.memory_space<vmem>>, %arg8: memref<32x16xf32, #tpu.memory_space<vmem>>) attributes {dimension_semantics = [#tpu.dimension_semantics<parallel>], iteration_bounds = array<i64: 2>, scalar_prefetch = 0 : i64, scratch_operands = 0 : i64, tpu.core_type = #tpu.core_type<tc>, window_params = [{transform_indices = @transform_0, window_bounds = array<i64: 32, 32>}, {pipeline_mode = #tpu.pipeline_mode<synchronous>, transform_indices = @transform_1, window_bounds = array<i64: 32, 32>}, {pipeline_mode = #tpu.pipeline_mode<synchronous>, transform_indices = @transform_2, window_bounds = array<i64: 1, 32>}, {pipeline_mode = #tpu.pipeline_mode<synchronous>, transform_indices = @transform_3, window_bounds = array<i64: 32, 32>}, {pipeline_mode = #tpu.pipeline_mode<synchronous>, transform_indices = @transform_4, window_bounds = array<i64: 1, 32>}, {pipeline_mode = #tpu.pipeline_mode<synchronous>, transform_indices = @transform_5, window_bounds = array<i64: 32, 16>}, {pipeline_mode = #tpu.pipeline_mode<synchronous>, transform_indices = @transform_6, window_bounds = array<i64: 1, 16>}, {transform_indices = @transform_7, window_bounds = array<i64: 32, 16>}]} {
    %c0 = arith.constant 0 : index
    %c0_0 = arith.constant 0 : index
    %0 = vector.load %arg1[%c0, %c0_0] : memref<32x32xf32, #tpu.memory_space<vmem>>, vector<32x32xf32>
    %c0_1 = arith.constant 0 : index
    %c0_2 = arith.constant 0 : index
    %1 = vector.load %arg2[%c0_1, %c0_2] : memref<32x32xf32, #tpu.memory_space<vmem>>, vector<32x32xf32>
    %cst = arith.constant dense<0.000000e+00> : vector<32x32xf32>
    %2 = tpu.matmul %0, %1, %cst {dimension_numbers = #tpu.dot_dimension_numbers<[1], [0], [0], [1], [0, 0, 1, 1], [], []>} : vector<32x32xf32>, vector<32x32xf32>, vector<32x32xf32> -> vector<32x32xf32>
    %c0_3 = arith.constant 0 : index
    %c0_4 = arith.constant 0 : index
    %3 = vector.load %arg3[%c0_3, %c0_4] : memref<1x32xf32, #tpu.memory_space<vmem>>, vector<1x32xf32>
    %4 = vector.broadcast %3 : vector<1x32xf32> to vector<32x32xf32>
    %5 = arith.addf %2, %4 : vector<32x32xf32>
    %cst_5 = arith.constant 0.000000e+00 : f32
    %6 = vector.broadcast %cst_5 : f32 to vector<32x32xf32>
    %7 = arith.maximumf %5, %6 : vector<32x32xf32>
    %c0_6 = arith.constant 0 : index
    %c0_7 = arith.constant 0 : index
    %8 = vector.load %arg4[%c0_6, %c0_7] : memref<32x32xf32, #tpu.memory_space<vmem>>, vector<32x32xf32>
    %cst_8 = arith.constant dense<0.000000e+00> : vector<32x32xf32>
    %9 = tpu.matmul %7, %8, %cst_8 {dimension_numbers = #tpu.dot_dimension_numbers<[1], [0], [0], [1], [0, 0, 1, 1], [], []>} : vector<32x32xf32>, vector<32x32xf32>, vector<32x32xf32> -> vector<32x32xf32>
    %c0_9 = arith.constant 0 : index
    %c0_10 = arith.constant 0 : index
    %10 = vector.load %arg5[%c0_9, %c0_10] : memref<1x32xf32, #tpu.memory_space<vmem>>, vector<1x32xf32>
    %11 = vector.broadcast %10 : vector<1x32xf32> to vector<32x32xf32>
    %12 = arith.addf %9, %11 : vector<32x32xf32>
    %cst_11 = arith.constant 0.000000e+00 : f32
    %13 = vector.broadcast %cst_11 : f32 to vector<32x32xf32>
    %14 = arith.maximumf %12, %13 : vector<32x32xf32>
    %c0_12 = arith.constant 0 : index
    %c0_13 = arith.constant 0 : index
    %15 = vector.load %arg6[%c0_12, %c0_13] : memref<32x16xf32, #tpu.memory_space<vmem>>, vector<32x16xf32>
    %cst_14 = arith.constant dense<0.000000e+00> : vector<32x16xf32>
    %16 = tpu.matmul %14, %15, %cst_14 {dimension_numbers = #tpu.dot_dimension_numbers<[1], [0], [0], [1], [0, 0, 1, 1], [], []>} : vector<32x32xf32>, vector<32x16xf32>, vector<32x16xf32> -> vector<32x16xf32>
    %c0_15 = arith.constant 0 : index
    %c0_16 = arith.constant 0 : index
    %17 = vector.load %arg7[%c0_15, %c0_16] : memref<1x16xf32, #tpu.memory_space<vmem>>, vector<1x16xf32>
    %18 = vector.broadcast %17 : vector<1x16xf32> to vector<32x16xf32>
    %19 = arith.addf %16, %18 : vector<32x16xf32>
    %c0_17 = arith.constant 0 : index
    %c0_18 = arith.constant 0 : index
    %20 = vector.load %arg8[%c0_17, %c0_18] : memref<32x16xf32, #tpu.memory_space<vmem>>, vector<32x16xf32>
    tpu.vector_store %arg8[%c0_17, %c0_18], %19 {strides = array<i32>} : memref<32x16xf32, #tpu.memory_space<vmem>>, vector<32x16xf32>,
    return
  }
  func.func @transform_0(%arg0: i32) -> (i32, i32) {
    %c0_i32 = arith.constant 0 : i32
    %c0_i32_0 = arith.constant 0 : i32
    return %arg0, %c0_i32 : i32, i32
  }
  func.func @transform_1(%arg0: i32) -> (i32, i32) {
    %c0_i32 = arith.constant 0 : i32
    %c0_i32_0 = arith.constant 0 : i32
    %c0_i32_1 = arith.constant 0 : i32
    return %c0_i32, %c0_i32_0 : i32, i32
  }
  func.func @transform_2(%arg0: i32) -> (i32, i32) {
    %c0_i32 = arith.constant 0 : i32
    %c0_i32_0 = arith.constant 0 : i32
    %c0_i32_1 = arith.constant 0 : i32
    return %c0_i32, %c0_i32_0 : i32, i32
  }
  func.func @transform_3(%arg0: i32) -> (i32, i32) {
    %c0_i32 = arith.constant 0 : i32
    %c0_i32_0 = arith.constant 0 : i32
    %c0_i32_1 = arith.constant 0 : i32
    return %c0_i32, %c0_i32_0 : i32, i32
  }
  func.func @transform_4(%arg0: i32) -> (i32, i32) {
    %c0_i32 = arith.constant 0 : i32
    %c0_i32_0 = arith.constant 0 : i32
    %c0_i32_1 = arith.constant 0 : i32
    return %c0_i32, %c0_i32_0 : i32, i32
  }
  func.func @transform_5(%arg0: i32) -> (i32, i32) {
    %c0_i32 = arith.constant 0 : i32
    %c0_i32_0 = arith.constant 0 : i32
    %c0_i32_1 = arith.constant 0 : i32
    return %c0_i32, %c0_i32_0 : i32, i32
  }
  func.func @transform_6(%arg0: i32) -> (i32, i32) {
    %c0_i32 = arith.constant 0 : i32
    %c0_i32_0 = arith.constant 0 : i32
    %c0_i32_1 = arith.constant 0 : i32
    return %c0_i32, %c0_i32_0 : i32, i32
  }
  func.func @transform_7(%arg0: i32) -> (i32, i32) {
    %c0_i32 = arith.constant 0 : i32
    %c0_i32_0 = arith.constant 0 : i32
    return %arg0, %c0_i32 : i32, i32
  }
}

</mosaic_0001>

<llo_original>
// kernel: tpu_custom_call.1
$region0: #{tpu_custom_call.1}
  #allocation0 [shape = 'u32[]', space=smem, size = 0x4, offset = 0x4, fixed_abs, tag = 'smem constant byte address 0x4 - core index']
  #allocation1 [shape = 'u32[144,128]{1,0:T(1,128)}', space=vmem, size = 0x12000, scoped, tag = 'internal scratch']
  %s0 = inlined_call_operand.vmem [shape: f32[64,32], index: 0, kind: input, shape index: {}]
  %s1 = inlined_call_operand.vmem [shape: f32[32,32], index: 1, kind: input, shape index: {}]
  %s2 = inlined_call_operand.vmem [shape: f32[1,32], index: 2, kind: input, shape index: {}]
  %s3 = inlined_call_operand.vmem [shape: f32[32,32], index: 3, kind: input, shape index: {}]
  %s4 = inlined_call_operand.vmem [shape: f32[1,32], index: 4, kind: input, shape index: {}]
  %s5 = inlined_call_operand.vmem [shape: f32[32,16], index: 5, kind: input, shape index: {}]
  %s6 = inlined_call_operand.vmem [shape: f32[1,16], index: 6, kind: input, shape index: {}]
  %s7 = inlined_call_operand.vmem [shape: f32[64,16], index: 7, kind: output, shape index: {}]
  %s8 = sld [smem:[#allocation0]]
  $region61: #{tpu_custom_call.1} parent=0
    _
  %s10 = ssub.s32 1, %s8
  %s11 = scalar_select 0, %s10, %s8
  loop: start=0, step=1, limit=4
  $region2: #{tpu_custom_call.1} parent=0 // loop_pre_header
    _
  $region3: #{tpu_custom_call.1} parent=0 // loop_header
    %s13 = sphi 0, %s17
    %p14 = scmp.ge.s32.totalorder %s13, 4
    %s23 = sphi 0, %s25
    %s26 = sphi 0, %s23
    %s27 = sphi 0, %s26
    %s43 = sphi 0, %s27
    %s47 = sphi 0, %s47
    %s49 = sphi 0, %s47
    %s50 = sphi 0, %s49
    %s64 = sphi 0, %s50
    %s68 = sphi 0, %s68
    %s70 = sphi 0, %s68
    %s71 = sphi 0, %s70
    %s85 = sphi 0, %s71
    %s89 = sphi 0, %s89
    %s91 = sphi 0, %s89
    %s92 = sphi 0, %s91
    %s106 = sphi 0, %s92
    %s110 = sphi 0, %s110
    %s112 = sphi 0, %s110
    %s113 = sphi 0, %s112
    %s127 = sphi 0, %s113
    %s131 = sphi 0, %s131
    %s133 = sphi 0, %s131
    %s134 = sphi 0, %s133
    %s148 = sphi 0, %s134
    %s152 = sphi 0, %s152
    %s154 = sphi 0, %s152
    %s155 = sphi 0, %s154
    %s169 = sphi 0, %s155
    %s175 = sphi 0, %s177
    %s178 = sphi 0, %s175
    %s179 = sphi 0, %s178
    %s195 = sphi 0, %s179
  $region4: #{tpu_custom_call.1} parent=0 // loop_header_branch
    %16 = sbr.rel (%p14) target = $region8
  $region5: #{tpu_custom_call.1} parent=0 // loop_body
    %s18 = ssub.s32 %s13, 1
    %s19 = ssub.s32 %s13, 2
    %s20 = sadd.s32 %s13, 1
    %s21 = ssub.s32 %s13, %s20
    %p22 = scmp.eq.s32.totalorder %s21, 0
    %s24 = sadd.s32 %s23, 1
    %s25 = scalar_select %p22, %s23, %s24
    %p28 = pneg %p22
    %p29 = scmp.eq.s32.totalorder %s13, 1
    %p30 = por %p28, %p29
    %p31 = scmp.ne.s32.totalorder %s23, %s26
    %p32 = scmp.eq.s32.totalorder %s13, 0
    %p33 = por %p31, %p32
    %p34 = scmp.ne.s32.totalorder %s23, %s26
    %p35 = scmp.eq.s32.totalorder %s18, 1
    %p36 = por %p34, %p35
    %p37 = scmp.ne.s32.totalorder %s26, %s27
    %p38 = scmp.eq.s32.totalorder %s18, 0
    %p39 = por %p37, %p38
    %p40 = scmp.ne.s32.totalorder %s26, %s27
    %p41 = scmp.eq.s32.totalorder %s19, 1
    %p42 = por %p40, %p41
    %p44 = scmp.ne.s32.totalorder %s27, %s43
    %p45 = scmp.eq.s32.totalorder %s19, 0
    %p46 = por %p44, %p45
    %s48 = sadd.s32 %s47, 1
    %p51 = scmp.eq.s32.totalorder %s13, 1
    %p52 = scmp.ne.s32.totalorder %s47, %s49
    %p53 = scmp.eq.s32.totalorder %s13, 0
    %p54 = por %p52, %p53
    %p55 = scmp.ne.s32.totalorder %s47, %s49
    %p56 = scmp.eq.s32.totalorder %s18, 1
    %p57 = por %p55, %p56
    %p58 = scmp.ne.s32.totalorder %s49, %s50
    %p59 = scmp.eq.s32.totalorder %s18, 0
    %p60 = por %p58, %p59
    %p61 = scmp.ne.s32.totalorder %s49, %s50
    %p62 = scmp.eq.s32.totalorder %s19, 1
    %p63 = por %p61, %p62
    %p65 = scmp.ne.s32.totalorder %s50, %s64
    %p66 = scmp.eq.s32.totalorder %s19, 0
    %p67 = por %p65, %p66
    %s69 = sadd.s32 %s68, 1
    %p72 = scmp.eq.s32.totalorder %s13, 1
    %p73 = scmp.ne.s32.totalorder %s68, %s70
    %p74 = scmp.eq.s32.totalorder %s13, 0
    %p75 = por %p73, %p74
    %p76 = scmp.ne.s32.totalorder %s68, %s70
    %p77 = scmp.eq.s32.totalorder %s18, 1
    %p78 = por %p76, %p77
    %p79 = scmp.ne.s32.totalorder %s70, %s71
    %p80 = scmp.eq.s32.totalorder %s18, 0
    %p81 = por %p79, %p80
    %p82 = scmp.ne.s32.totalorder %s70, %s71
    %p83 = scmp.eq.s32.totalorder %s19, 1
    %p84 = por %p82, %p83
    %p86 = scmp.ne.s32.totalorder %s71, %s85
    %p87 = scmp.eq.s32.totalorder %s19, 0
    %p88 = por %p86, %p87
    %s90 = sadd.s32 %s89, 1
    %p93 = scmp.eq.s32.totalorder %s13, 1
    %p94 = scmp.ne.s32.totalorder %s89, %s91
    %p95 = scmp.eq.s32.totalorder %s13, 0
    %p96 = por %p94, %p95
    %p97 = scmp.ne.s32.totalorder %s89, %s91
    %p98 = scmp.eq.s32.totalorder %s18, 1
    %p99 = por %p97, %p98
    %p100 = scmp.ne.s32.totalorder %s91, %s92
    %p101 = scmp.eq.s32.totalorder %s18, 0
    %p102 = por %p100, %p101
    %p103 = scmp.ne.s32.totalorder %s91, %s92
    %p104 = scmp.eq.s32.totalorder %s19, 1
    %p105 = por %p103, %p104
    %p107 = scmp.ne.s32.totalorder %s92, %s106
    %p108 = scmp.eq.s32.totalorder %s19, 0
    %p109 = por %p107, %p108
    %s111 = sadd.s32 %s110, 1
    %p114 = scmp.eq.s32.totalorder %s13, 1
    %p115 = scmp.ne.s32.totalorder %s110, %s112
    %p116 = scmp.eq.s32.totalorder %s13, 0
    %p117 = por %p115, %p116
    %p118 = scmp.ne.s32.totalorder %s110, %s112
    %p119 = scmp.eq.s32.totalorder %s18, 1
    %p120 = por %p118, %p119
    %p121 = scmp.ne.s32.totalorder %s112, %s113
    %p122 = scmp.eq.s32.totalorder %s18, 0
    %p123 = por %p121, %p122
    %p124 = scmp.ne.s32.totalorder %s112, %s113
    %p125 = scmp.eq.s32.totalorder %s19, 1
    %p126 = por %p124, %p125
    %p128 = scmp.ne.s32.totalorder %s113, %s127
    %p129 = scmp.eq.s32.totalorder %s19, 0
    %p130 = por %p128, %p129
    %s132 = sadd.s32 %s131, 1
    %p135 = scmp.eq.s32.totalorder %s13, 1
    %p136 = scmp.ne.s32.totalorder %s131, %s133
    %p137 = scmp.eq.s32.totalorder %s13, 0
    %p138 = por %p136, %p137
    %p139 = scmp.ne.s32.totalorder %s131, %s133
    %p140 = scmp.eq.s32.totalorder %s18, 1
    %p141 = por %p139, %p140
    %p142 = scmp.ne.s32.totalorder %s133, %s134
    %p143 = scmp.eq.s32.totalorder %s18, 0
    %p144 = por %p142, %p143
    %p145 = scmp.ne.s32.totalorder %s133, %s134
    %p146 = scmp.eq.s32.totalorder %s19, 1
    %p147 = por %p145, %p146
    %p149 = scmp.ne.s32.totalorder %s134, %s148
    %p150 = scmp.eq.s32.totalorder %s19, 0
    %p151 = por %p149, %p150
    %s153 = sadd.s32 %s152, 1
    %p156 = scmp.eq.s32.totalorder %s13, 1
    %p157 = scmp.ne.s32.totalorder %s152, %s154
    %p158 = scmp.eq.s32.totalorder %s13, 0
    %p159 = por %p157, %p158
    %p160 = scmp.ne.s32.totalorder %s152, %s154
    %p161 = scmp.eq.s32.totalorder %s18, 1
    %p162 = por %p160, %p161
    %p163 = scmp.ne.s32.totalorder %s154, %s155
    %p164 = scmp.eq.s32.totalorder %s18, 0
    %p165 = por %p163, %p164
    %p166 = scmp.ne.s32.totalorder %s154, %s155
    %p167 = scmp.eq.s32.totalorder %s19, 1
    %p168 = por %p166, %p167
    %p170 = scmp.ne.s32.totalorder %s155, %s169
    %p171 = scmp.eq.s32.totalorder %s19, 0
    %p172 = por %p170, %p171
    %s173 = ssub.s32 %s13, %s20
    %p174 = scmp.eq.s32.totalorder %s173, 0
    %s176 = sadd.s32 %s175, 1
    %s177 = scalar_select %p174, %s175, %s176
    %p180 = pneg %p174
    %p181 = scmp.eq.s32.totalorder %s13, 1
    %p182 = por %p180, %p181
    %p183 = scmp.ne.s32.totalorder %s175, %s178
    %p184 = scmp.eq.s32.totalorder %s13, 0
    %p185 = por %p183, %p184
    %p186 = scmp.ne.s32.totalorder %s175, %s178
    %p187 = scmp.eq.s32.totalorder %s18, 1
    %p188 = por %p186, %p187
    %p189 = scmp.ne.s32.totalorder %s178, %s179
    %p190 = scmp.eq.s32.totalorder %s18, 0
    %p191 = por %p189, %p190
    %p192 = scmp.ne.s32.totalorder %s178, %s179
    %p193 = scmp.eq.s32.totalorder %s19, 1
    %p194 = por %p192, %p193
    %p196 = scmp.ne.s32.totalorder %s179, %s195
    %p197 = scmp.eq.s32.totalorder %s19, 0
    %p198 = por %p196, %p197
    %p199 = scmp.le.s32.totalorder 1, %s13
    %p200 = scmp.lt.s32.totalorder %s13, 3
    %p201 = pnand %p199, %p200
    %p202 = pneg %p201
    // Predicated region
    $region9: #{tpu_custom_call.1} parent=5 // pred_check
      _
    $region10: #{tpu_custom_call.1} parent=5 // pred_check_branch
      %204 = sbr.rel (%p201) target = $region12
    $region11: #{tpu_custom_call.1} parent=5 // pred_region
      %s205 = ssub.s32 %s13, 1
      // Predicated region
      $region13: #{tpu_custom_call.1} parent=11 // pred_check
        %p206 = pneg %p60
      $region14: #{tpu_custom_call.1} parent=11 // pred_check_branch
        %208 = sbr.rel (%p206) target = $region16
      $region15: #{tpu_custom_call.1} parent=11 // pred_region
        _
      $region16: #{tpu_custom_call.1} parent=11 // pred_fallthru
        _
      // Predicated region
      $region17: #{tpu_custom_call.1} parent=11 // pred_check
        %p209 = pneg %p81
      $region18: #{tpu_custom_call.1} parent=11 // pred_check_branch
        %211 = sbr.rel (%p209) target = $region20
      $region19: #{tpu_custom_call.1} parent=11 // pred_region
        _
      $region20: #{tpu_custom_call.1} parent=11 // pred_fallthru
        _
      // Predicated region
      $region21: #{tpu_custom_call.1} parent=11 // pred_check
        %p212 = pneg %p102
      $region22: #{tpu_custom_call.1} parent=11 // pred_check_branch
        %214 = sbr.rel (%p212) target = $region24
      $region23: #{tpu_custom_call.1} parent=11 // pred_region
        _
      $region24: #{tpu_custom_call.1} parent=11 // pred_fallthru
        _
      // Predicated region
      $region25: #{tpu_custom_call.1} parent=11 // pred_check
        %p215 = pneg %p123
      $region26: #{tpu_custom_call.1} parent=11 // pred_check_branch
        %217 = sbr.rel (%p215) target = $region28
      $region27: #{tpu_custom_call.1} parent=11 // pred_region
        _
      $region28: #{tpu_custom_call.1} parent=11 // pred_fallthru
        _
      // Predicated region
      $region29: #{tpu_custom_call.1} parent=11 // pred_check
        %p218 = pneg %p144
      $region30: #{tpu_custom_call.1} parent=11 // pred_check_branch
        %220 = sbr.rel (%p218) target = $region32
      $region31: #{tpu_custom_call.1} parent=11 // pred_region
        _
      $region32: #{tpu_custom_call.1} parent=11 // pred_fallthru
        _
      // Predicated region
      $region33: #{tpu_custom_call.1} parent=11 // pred_check
        %p221 = pneg %p165
      $region34: #{tpu_custom_call.1} parent=11 // pred_check_branch
        %223 = sbr.rel (%p221) target = $region36
      $region35: #{tpu_custom_call.1} parent=11 // pred_region
        _
      $region36: #{tpu_custom_call.1} parent=11 // pred_fallthru
        _
    $region12: #{tpu_custom_call.1} parent=5 // pred_fallthru
      _
    %p224 = scmp.lt.s32.totalorder %s13, 2
    // Predicated region
    $region37: #{tpu_custom_call.1} parent=5 // pred_check
      %p225 = pneg %p224
    $region38: #{tpu_custom_call.1} parent=5 // pred_check_branch
      %227 = sbr.rel (%p225) target = $region40
    $region39: #{tpu_custom_call.1} parent=5 // pred_region
      // Predicated region
      $region41: #{tpu_custom_call.1} parent=39 // pred_check
        %p228 = pneg %p33
      $region42: #{tpu_custom_call.1} parent=39 // pred_check_branch
        %230 = sbr.rel (%p228) target = $region44
      $region43: #{tpu_custom_call.1} parent=39 // pred_region
        %s231 = smul.u32 4, %s13
        %p232 = scmp.lt.s32.totalorder %s231, 7
        %s233 = scalar_select %p232, %s231, 7
        %s234 = smul.addr %s233, 8
        %s235 = scalar_lea.vmem %s0, %s234
        %s236 = smul.u32 4, %s13
      $region44: #{tpu_custom_call.1} parent=39 // pred_fallthru
        _
    $region40: #{tpu_custom_call.1} parent=5 // pred_fallthru
      _
    %p237 = scmp.le.s32.totalorder 1, %s13
    %p238 = scmp.lt.s32.totalorder %s13, 3
    %p239 = pnand %p237, %p238
    %p240 = pneg %p239
    // Predicated region
    $region45: #{tpu_custom_call.1} parent=5 // pred_check
      _
    $region46: #{tpu_custom_call.1} parent=5 // pred_check_branch
      %242 = sbr.rel (%p239) target = $region48
    $region47: #{tpu_custom_call.1} parent=5 // pred_region
      %s243 = ssub.s32 %s13, 1
      %s244 = smul.u32 4, %s18
      %p245 = scmp.lt.s32.totalorder %s244, 7
      %s246 = scalar_select %p245, %s244, 7
      %s247 = smul.addr %s246, 8
      %s248 = scalar_lea.vmem %s0, %s247
      %p249 = pneg %p39
      %p250 = pneg %p36
      %p251 = pneg %p60
      %p252 = pneg %p57
      %p253 = pneg %p81
      %p254 = pneg %p78
      %p255 = pneg %p102
      %p256 = pneg %p99
      %p257 = pneg %p123
      %p258 = pneg %p120
      %p259 = pneg %p144
      %p260 = pneg %p141
      %p261 = pneg %p165
      %p262 = pneg %p162
      %p263 = pneg %p191
      %p264 = pneg %p188
      %s265 = smul.u32 4, %s18
      %p266 = scmp.lt.s32.totalorder %s265, 7
      %s267 = scalar_select %p266, %s265, 7
      %s268 = smul.addr %s267, 8
      %s269 = scalar_lea.vmem %s7, %s268
      %s270 = smul.u32 4, %s18
      %p271 = scmp.lt.s32.totalorder %s270, 7
      %s272 = scalar_select %p271, %s270, 7
      %s273 = smul.addr %s272, 8
      %s274 = scalar_lea.vmem %s0, %s273
      %s275 = smul.u32 4, %s18
      %s276 = smul.u32 4, %s18
      %p277 = scmp.lt.s32.totalorder %s276, 7
      %s278 = scalar_select %p277, %s276, 7
      %s279 = smul.addr %s278, 8
      %s280 = scalar_lea.vmem %s7, %s279
      %s281 = smul.u32 4, %s18
      %v282 = vld [vmem:[%s274] sm:$0xff]
      %v283 = vld [vmem:[%s274 + $0x8] sm:$0xff]
      %v284 = vld [vmem:[%s274 + $0x10] sm:$0xff]
      %v285 = vld [vmem:[%s274 + $0x18] sm:$0xff]
      %v286 = vld [vmem:[%s1] sm:$0xff]
      %v287 = vld [vmem:[%s1 + $0x8] sm:$0xff]
      %v288 = vld [vmem:[%s1 + $0x10] sm:$0xff]
      %v289 = vld [vmem:[%s1 + $0x18] sm:$0xff]
      %v290 = vld [vmem:[%s2] sm:$0x1]
      %v292 = vlaneseq
      %v293 = vshrl.u32 %v292, 7
      %v294 = vsub.s32 0, %v293
      %v295 = vrot.slane %v290, %v294
      %vm297 = vcmask 261120
      %v299 = vsel %vm297, %v282, 0
      %v302 = vsel %vm297, %v283, 0
      %v305 = vsel %vm297, %v284, 0
      %v308 = vsel %vm297, %v285, 0
      %310 = vmatprep.subr.mxu0 0.0
      %311 = vmatpush1.msra.mxu0 %v286
      %312 = vmatprep.subr.mxu0 0.0
      %313 = vmatpush1.msra.mxu0 %v287
      %314 = vmatprep.subr.mxu0 0.0
      %315 = vmatpush1.msra.mxu0 %v288
      %316 = vmatprep.subr.mxu0 0.0
      %317 = vmatpush1.msra.mxu0 %v289
      %318 = vmatprep.subr.mxu0 0.0
      %319 = vmatpush1.msra.mxu0 0.0
      %320 = vmatprep.subr.mxu0 0.0
      %321 = vmatpush1.msra.mxu0 0.0
      %322 = vmatprep.subr.mxu0 0.0
      %323 = vmatpush1.msra.mxu0 0.0
      %324 = vmatprep.subr.mxu0 0.0
      %325 = vmatpush1.msra.mxu0 0.0
      %326 = vmatprep.subr.mxu0 0.0
      %327 = vmatpush1.msra.mxu0 0.0
      %328 = vmatprep.subr.mxu0 0.0
      %329 = vmatpush1.msra.mxu0 0.0
      %330 = vmatprep.subr.mxu0 0.0
      %331 = vmatpush1.msra.mxu0 0.0
      %332 = vmatprep.subr.mxu0 0.0
      %333 = vmatpush1.msra.mxu0 0.0
      %334 = vmatprep.subr.mxu0 0.0
      %335 = vmatpush1.msra.mxu0 0.0
      %336 = vmatprep.subr.mxu0 0.0
      %337 = vmatpush1.msra.mxu0 0.0
      %338 = vmatprep.subr.mxu0 0.0
      %339 = vmatpush1.msra.mxu0 0.0
      %340 = vmatprep.subr.mxu0 0.0
      %341 = vmatpush1.msra.mxu0 0.0
      %342 = vmatprep.subr.mxu0 0.0
      %343 = vmatpush1.msra.mxu0 0.0
      %344 = vmatprep.subr.mxu0 0.0
      %345 = vmatpush1.msra.mxu0 0.0
      %346 = vmatprep.subr.mxu0 0.0
      %347 = vmatpush1.msra.mxu0 0.0
      %348 = vmatprep.subr.mxu0 0.0
      %349 = vmatpush1.msra.mxu0 0.0
      %350 = vmatprep.subr.mxu0 0.0
      %351 = vmatpush1.msra.mxu0 0.0
      %352 = vmatprep.subr.mxu0 0.0
      %353 = vmatpush1.msra.mxu0 0.0
      %354 = vmatprep.subr.mxu0 0.0
      %355 = vmatpush1.msra.mxu0 0.0
      %356 = vmatprep.subr.mxu0 0.0
      %357 = vmatpush1.msra.mxu0 0.0
      %358 = vmatprep.subr.mxu0 0.0
      %359 = vmatpush1.msra.mxu0 0.0
      %360 = vmatprep.subr.mxu0 0.0
      %361 = vmatpush1.msra.mxu0 0.0
      %362 = vmatprep.subr.mxu0 0.0
      %363 = vmatpush1.msra.mxu0 0.0
      %364 = vmatprep.subr.mxu0 0.0
      %365 = vmatpush1.msra.mxu0 0.0
      %366 = vmatprep.subr.mxu0 0.0
      %367 = vmatpush1.msra.mxu0 0.0
      %368 = vmatprep.subr.mxu0 0.0
      %369 = vmatpush1.msra.mxu0 0.0
      %370 = vmatprep.subr.mxu0 0.0
      %371 = vmatpush1.msra.mxu0 0.0
      %372 = vmatprep.subr.mxu0 0.0
      %373 = vmatpush1.msra.mxu0 0.0
      %374 = vmatprep.mubr.f32.mxu0 0.0
      %375 = vmatmul.mubr.f32.gmra.mrb[0].mxu0 %v299
      %v376 = vpop.f32.mrb[0].mxu0
      %v377 = vadd.f32 %v295, %v376
      %v378 = vpop.f32.mrb[0].mxu0
      %379 = vmatprep.mubr.f32.mxu0 0.0
      %380 = vmatmul.mubr.f32.gmra.mrb[0].mxu0 %v302
      %v381 = vpop.f32.mrb[0].mxu0
      %v382 = vadd.f32 %v295, %v381
      %v383 = vpop.f32.mrb[0].mxu0
      %384 = vmatprep.mubr.f32.mxu0 0.0
      %385 = vmatmul.mubr.f32.gmra.mrb[0].mxu0 %v305
      %v386 = vpop.f32.mrb[0].mxu0
      %v387 = vadd.f32 %v295, %v386
      %v388 = vpop.f32.mrb[0].mxu0
      %389 = vmatprep.mubr.f32.mxu0 0.0
      %390 = vmatmul.mubr.f32.gmra.mrb[0].mxu0 %v308
      %v391 = vpop.f32.mrb[0].mxu0
      %v392 = vadd.f32 %v295, %v391
      %v393 = vpop.f32.mrb[0].mxu0
      %394 = vdwg.mxu0
      %v395 = vmax.f32 %v377, 0.0
      %v396 = vmax.f32 %v382, 0.0
      %v397 = vmax.f32 %v387, 0.0
      %v398 = vmax.f32 %v392, 0.0
      %v399 = vld [vmem:[%s3] sm:$0xff]
      %v400 = vld [vmem:[%s3 + $0x8] sm:$0xff]
      %v401 = vld [vmem:[%s3 + $0x10] sm:$0xff]
      %v402 = vld [vmem:[%s3 + $0x18] sm:$0xff]
      %v403 = vld [vmem:[%s4] sm:$0x1]
      %v405 = vlaneseq
      %v406 = vshrl.u32 %v405, 7
      %v407 = vsub.s32 0, %v406
      %v408 = vrot.slane %v403, %v407
      %v411 = vsel %vm297, %v395, 0
      %v414 = vsel %vm297, %v396, 0
      %v417 = vsel %vm297, %v397, 0
      %v420 = vsel %vm297, %v398, 0
      %422 = vmatprep.subr.mxu0 0.0
      %423 = vmatpush1.msra.mxu0 %v399
      %424 = vmatprep.subr.mxu0 0.0
      %425 = vmatpush1.msra.mxu0 %v400
      %426 = vmatprep.subr.mxu0 0.0
      %427 = vmatpush1.msra.mxu0 %v401
      %428 = vmatprep.subr.mxu0 0.0
      %429 = vmatpush1.msra.mxu0 %v402
      %430 = vmatprep.subr.mxu0 0.0
      %431 = vmatpush1.msra.mxu0 0.0
      %432 = vmatprep.subr.mxu0 0.0
      %433 = vmatpush1.msra.mxu0 0.0
      %434 = vmatprep.subr.mxu0 0.0
      %435 = vmatpush1.msra.mxu0 0.0
      %436 = vmatprep.subr.mxu0 0.0
      %437 = vmatpush1.msra.mxu0 0.0
      %438 = vmatprep.subr.mxu0 0.0
      %439 = vmatpush1.msra.mxu0 0.0
      %440 = vmatprep.subr.mxu0 0.0
      %441 = vmatpush1.msra.mxu0 0.0
      %442 = vmatprep.subr.mxu0 0.0
      %443 = vmatpush1.msra.mxu0 0.0
      %444 = vmatprep.subr.mxu0 0.0
      %445 = vmatpush1.msra.mxu0 0.0
      %446 = vmatprep.subr.mxu0 0.0
      %447 = vmatpush1.msra.mxu0 0.0
      %448 = vmatprep.subr.mxu0 0.0
      %449 = vmatpush1.msra.mxu0 0.0
      %450 = vmatprep.subr.mxu0 0.0
      %451 = vmatpush1.msra.mxu0 0.0
      %452 = vmatprep.subr.mxu0 0.0
      %453 = vmatpush1.msra.mxu0 0.0
      %454 = vmatprep.subr.mxu0 0.0
      %455 = vmatpush1.msra.mxu0 0.0
      %456 = vmatprep.subr.mxu0 0.0
      %457 = vmatpush1.msra.mxu0 0.0
      %458 = vmatprep.subr.mxu0 0.0
      %459 = vmatpush1.msra.mxu0 0.0
      %460 = vmatprep.subr.mxu0 0.0
      %461 = vmatpush1.msra.mxu0 0.0
      %462 = vmatprep.subr.mxu0 0.0
      %463 = vmatpush1.msra.mxu0 0.0
      %464 = vmatprep.subr.mxu0 0.0
      %465 = vmatpush1.msra.mxu0 0.0
      %466 = vmatprep.subr.mxu0 0.0
      %467 = vmatpush1.msra.mxu0 0.0
      %468 = vmatprep.subr.mxu0 0.0
      %469 = vmatpush1.msra.mxu0 0.0
      %470 = vmatprep.subr.mxu0 0.0
      %471 = vmatpush1.msra.mxu0 0.0
      %472 = vmatprep.subr.mxu0 0.0
      %473 = vmatpush1.msra.mxu0 0.0
      %474 = vmatprep.subr.mxu0 0.0
      %475 = vmatpush1.msra.mxu0 0.0
      %476 = vmatprep.subr.mxu0 0.0
      %477 = vmatpush1.msra.mxu0 0.0
      %478 = vmatprep.subr.mxu0 0.0
      %479 = vmatpush1.msra.mxu0 0.0
      %480 = vmatprep.subr.mxu0 0.0
      %481 = vmatpush1.msra.mxu0 0.0
      %482 = vmatprep.subr.mxu0 0.0
      %483 = vmatpush1.msra.mxu0 0.0
      %484 = vmatprep.subr.mxu0 0.0
      %485 = vmatpush1.msra.mxu0 0.0
      %486 = vmatprep.mubr.f32.mxu0 0.0
      %487 = vmatmul.mubr.f32.gmra.mrb[0].mxu0 %v411
      %v488 = vpop.f32.mrb[0].mxu0
      %v489 = vadd.f32 %v408, %v488
      %v490 = vpop.f32.mrb[0].mxu0
      %491 = vmatprep.mubr.f32.mxu0 0.0
      %492 = vmatmul.mubr.f32.gmra.mrb[0].mxu0 %v414
      %v493 = vpop.f32.mrb[0].mxu0
      %v494 = vadd.f32 %v408, %v493
      %v495 = vpop.f32.mrb[0].mxu0
      %496 = vmatprep.mubr.f32.mxu0 0.0
      %497 = vmatmul.mubr.f32.gmra.mrb[0].mxu0 %v417
      %v498 = vpop.f32.mrb[0].mxu0
      %v499 = vadd.f32 %v408, %v498
      %v500 = vpop.f32.mrb[0].mxu0
      %501 = vmatprep.mubr.f32.mxu0 0.0
      %502 = vmatmul.mubr.f32.gmra.mrb[0].mxu0 %v420
      %v503 = vpop.f32.mrb[0].mxu0
      %v504 = vadd.f32 %v408, %v503
      %v505 = vpop.f32.mrb[0].mxu0
      %506 = vdwg.mxu0
      %v507 = vmax.f32 %v489, 0.0
      %v508 = vmax.f32 %v494, 0.0
      %v509 = vmax.f32 %v499, 0.0
      %v510 = vmax.f32 %v504, 0.0
      %v511 = vld [vmem:[%s5] sm:$0xff]
      %v512 = vld [vmem:[%s5 + $0x8] sm:$0xff]
      %v513 = vld [vmem:[%s5 + $0x10] sm:$0xff]
      %v514 = vld [vmem:[%s5 + $0x18] sm:$0xff]
      %v515 = vld [vmem:[%s6] sm:$0x1]
      %v517 = vlaneseq
      %v518 = vshrl.u32 %v517, 7
      %v519 = vsub.s32 0, %v518
      %v520 = vrot.slane %v515, %v519
      %v523 = vsel %vm297, %v507, 0
      %v526 = vsel %vm297, %v508, 0
      %v529 = vsel %vm297, %v509, 0
      %v532 = vsel %vm297, %v510, 0
      %534 = vmatprep.subr.mxu0 0.0
      %535 = vmatpush1.msra.mxu0 %v511
      %536 = vmatprep.subr.mxu0 0.0
      %537 = vmatpush1.msra.mxu0 %v512
      %538 = vmatprep.subr.mxu0 0.0
      %539 = vmatpush1.msra.mxu0 %v513
      %540 = vmatprep.subr.mxu0 0.0
      %541 = vmatpush1.msra.mxu0 %v514
      %542 = vmatprep.subr.mxu0 0.0
      %543 = vmatpush1.msra.mxu0 0.0
      %544 = vmatprep.subr.mxu0 0.0
      %545 = vmatpush1.msra.mxu0 0.0
      %546 = vmatprep.subr.mxu0 0.0
      %547 = vmatpush1.msra.mxu0 0.0
      %548 = vmatprep.subr.mxu0 0.0
      %549 = vmatpush1.msra.mxu0 0.0
      %550 = vmatprep.subr.mxu0 0.0
      %551 = vmatpush1.msra.mxu0 0.0
      %552 = vmatprep.subr.mxu0 0.0
      %553 = vmatpush1.msra.mxu0 0.0
      %554 = vmatprep.subr.mxu0 0.0
      %555 = vmatpush1.msra.mxu0 0.0
      %556 = vmatprep.subr.mxu0 0.0
      %557 = vmatpush1.msra.mxu0 0.0
      %558 = vmatprep.subr.mxu0 0.0
      %559 = vmatpush1.msra.mxu0 0.0
      %560 = vmatprep.subr.mxu0 0.0
      %561 = vmatpush1.msra.mxu0 0.0
      %562 = vmatprep.subr.mxu0 0.0
      %563 = vmatpush1.msra.mxu0 0.0
      %564 = vmatprep.subr.mxu0 0.0
      %565 = vmatpush1.msra.mxu0 0.0
      %566 = vmatprep.subr.mxu0 0.0
      %567 = vmatpush1.msra.mxu0 0.0
      %568 = vmatprep.subr.mxu0 0.0
      %569 = vmatpush1.msra.mxu0 0.0
      %570 = vmatprep.subr.mxu0 0.0
      %571 = vmatpush1.msra.mxu0 0.0
      %572 = vmatprep.subr.mxu0 0.0
      %573 = vmatpush1.msra.mxu0 0.0
      %574 = vmatprep.subr.mxu0 0.0
      %575 = vmatpush1.msra.mxu0 0.0
      %576 = vmatprep.subr.mxu0 0.0
      %577 = vmatpush1.msra.mxu0 0.0
      %578 = vmatprep.subr.mxu0 0.0
      %579 = vmatpush1.msra.mxu0 0.0
      %580 = vmatprep.subr.mxu0 0.0
      %581 = vmatpush1.msra.mxu0 0.0
      %582 = vmatprep.subr.mxu0 0.0
      %583 = vmatpush1.msra.mxu0 0.0
      %584 = vmatprep.subr.mxu0 0.0
      %585 = vmatpush1.msra.mxu0 0.0
      %586 = vmatprep.subr.mxu0 0.0
      %587 = vmatpush1.msra.mxu0 0.0
      %588 = vmatprep.subr.mxu0 0.0
      %589 = vmatpush1.msra.mxu0 0.0
      %590 = vmatprep.subr.mxu0 0.0
      %591 = vmatpush1.msra.mxu0 0.0
      %592 = vmatprep.subr.mxu0 0.0
      %593 = vmatpush1.msra.mxu0 0.0
      %594 = vmatprep.subr.mxu0 0.0
      %595 = vmatpush1.msra.mxu0 0.0
      %596 = vmatprep.subr.mxu0 0.0
      %597 = vmatpush1.msra.mxu0 0.0
      %598 = vmatprep.mubr.f32.mxu0 0.0
      %599 = vmatmul.mubr.f32.gmra.mrb[0].mxu0 %v523
      %v600 = vpop.f32.mrb[0].mxu0
      %v601 = vadd.f32 %v520, %v600
      %v602 = vpop.f32.mrb[0].mxu0
      %603 = vmatprep.mubr.f32.mxu0 0.0
      %604 = vmatmul.mubr.f32.gmra.mrb[0].mxu0 %v526
      %v605 = vpop.f32.mrb[0].mxu0
      %v606 = vadd.f32 %v520, %v605
      %v607 = vpop.f32.mrb[0].mxu0
      %608 = vmatprep.mubr.f32.mxu0 0.0
      %609 = vmatmul.mubr.f32.gmra.mrb[0].mxu0 %v529
      %v610 = vpop.f32.mrb[0].mxu0
      %v611 = vadd.f32 %v520, %v610
      %v612 = vpop.f32.mrb[0].mxu0
      %613 = vmatprep.mubr.f32.mxu0 0.0
      %614 = vmatmul.mubr.f32.gmra.mrb[0].mxu0 %v532
      %v615 = vpop.f32.mrb[0].mxu0
      %v616 = vadd.f32 %v520, %v615
      %v617 = vpop.f32.mrb[0].mxu0
      %618 = vdwg.mxu0
      %vm619 = vcmask 130048
      %620 = vst.msk [vmem:[%s280] sm:$0xff] %vm619, %v601
      %621 = vst.msk [vmem:[%s280 + $0x8] sm:$0xff] %vm619, %v606
      %622 = vst.msk [vmem:[%s280 + $0x10] sm:$0xff] %vm619, %v611
      %623 = vst.msk [vmem:[%s280 + $0x18] sm:$0xff] %vm619, %v616
      %s624 = smul.u32 4, %s18
      %p625 = scmp.lt.s32.totalorder %s624, 7
      %s626 = scalar_select %p625, %s624, 7
      %s627 = smul.addr %s626, 8
      %s628 = scalar_lea.vmem %s7, %s627
      // Predicated region
      $region49: #{tpu_custom_call.1} parent=47 // pred_check
        %p629 = pneg %p188
      $region50: #{tpu_custom_call.1} parent=47 // pred_check_branch
        %631 = sbr.rel (%p629) target = $region52
      $region51: #{tpu_custom_call.1} parent=47 // pred_region
        %s632 = smul.u32 4, %s18
      $region52: #{tpu_custom_call.1} parent=47 // pred_fallthru
        _
    $region48: #{tpu_custom_call.1} parent=5 // pred_fallthru
      _
    %p633 = scmp.le.s32.totalorder 2, %s13
    // Predicated region
    $region53: #{tpu_custom_call.1} parent=5 // pred_check
      %p634 = pneg %p633
    $region54: #{tpu_custom_call.1} parent=5 // pred_check_branch
      %636 = sbr.rel (%p634) target = $region56
    $region55: #{tpu_custom_call.1} parent=5 // pred_region
      %s637 = ssub.s32 %s13, 2
      // Predicated region
      $region57: #{tpu_custom_call.1} parent=55 // pred_check
        %p638 = pneg %p194
      $region58: #{tpu_custom_call.1} parent=55 // pred_check_branch
        %640 = sbr.rel (%p638) target = $region60
      $region59: #{tpu_custom_call.1} parent=55 // pred_region
        %s641 = smul.u32 4, %s19
        %p642 = scmp.lt.s32.totalorder %s641, 7
        %s643 = scalar_select %p642, %s641, 7
        %s644 = smul.addr %s643, 8
        %s645 = scalar_lea.vmem %s7, %s644
      $region60: #{tpu_custom_call.1} parent=55 // pred_fallthru
        _
    $region56: #{tpu_custom_call.1} parent=5 // pred_fallthru
      _
  $region6: #{tpu_custom_call.1} parent=0 // loop_footer
    %s17 = sadd.s32 1, %s13
  $region7: #{tpu_custom_call.1} parent=0 // loop_footer_branch
    %12 = sbr.rel target = $region3
  $region8: #{tpu_custom_call.1} parent=0 // loop_exit
    _

</llo_original>
